<compile_context>
chip_gen: v7x
topology: tpu7x:2x2x1
jax: 0.10.0
libtpu: 0.0.40
codegen_flags: <defaults>
</compile_context>

<pallas_src>
import functools
import math

import numpy as np
import jax
import jax.numpy as jnp
from jax.experimental import pallas as pl
from jax.experimental.pallas import tpu as pltpu


# -----------------------------------------------------------------------------
# Static R-MAC region computation (matches LF.roipool region generation).
# -----------------------------------------------------------------------------
def _rmac_regions(H, W, L):
    """Static R-MAC region boxes (i0, j0, hl, wl), matching LF.roipool."""
    ovr = 0.4
    steps = np.array([2, 3, 4, 5, 6, 7], dtype=np.float64)
    w = min(W, H)
    b = (max(H, W) - w) / (steps - 1)
    idx = int(np.argmin(np.abs(((w ** 2 - w * b) / (w ** 2)) - ovr)))
    Wd, Hd = 0, 0
    if H < W:
        Wd = idx + 1
    elif H > W:
        Hd = idx + 1

    regions = [(0, 0, H, W)]  # global MAC region: rpool(x)
    for l in range(1, L + 1):
        wl = math.floor(2 * w / (l + 1))
        wl2 = math.floor(wl / 2 - 1)
        b = 0 if (l + Wd) == 1 else (W - wl) / (l + Wd - 1)
        cenW = (np.floor(wl2 + np.arange(l - 1 + Wd + 1) * b) - wl2).astype(np.int64)
        b = 0 if (l + Hd) == 1 else (H - wl) / (l + Hd - 1)
        cenH = (np.floor(wl2 + np.arange(l - 1 + Hd + 1) * b) - wl2).astype(np.int64)
        for i_ in cenH.tolist():
            for j_ in cenW.tolist():
                if wl == 0:
                    continue
                # Clamp to a valid window.  NOTE: for non-square inputs with
                # negative centers this clamping may deviate slightly from the
                # original torch.narrow-based LF.roipool behavior.
                # TODO(synk): verify clamp vs. LF.roipool for extreme aspect ratios.
                i0 = int(max(0, min(int(i_), H - wl)))
                j0 = int(max(0, min(int(j_), W - wl)))
                regions.append((i0, j0, int(wl), int(wl)))
    return regions


# -----------------------------------------------------------------------------
# Generation-aware VMEM budgeting and channel-chunk selection.
# -----------------------------------------------------------------------------
def _tpu_vmem_bytes():
    try:
        return int(pltpu.get_tpu_info().vmem_capacity_bytes)
    except Exception:
        return 64 << 20  # conservative (v7x-sized) fallback


def _phys_block_bytes(H, W, tc, itemsize):
    """Physical VMEM footprint of an (H, W, tc) block incl. (8,128) tile padding."""
    sub = 8 * (4 // itemsize)                 # sublane packing: 8 (f32) / 16 (bf16)
    w_pad = -(-W // sub) * sub
    c_pad = -(-tc // 128) * 128
    return H * w_pad * c_pad * itemsize


def _pick_c_tile(C, H, W, itemsize, N, small_vmem):
    """Largest channel chunk (multiple of 128 dividing C, or C itself) whose
    physical (H, W, TC) block fits the per-buffer budget; on small-VMEM (v7x)
    parts with N == 1, keep at least 2 parallel grid steps for dual-TC."""
    per_buf = (8 << 20) if small_vmem else (16 << 20)
    cands = sorted({C} | {d for d in range(128, C, 128) if C % d == 0}, reverse=True)
    fitting = [d for d in cands if _phys_block_bytes(H, W, d, itemsize) <= per_buf]
    tc = fitting[0] if fitting else cands[-1]
    if small_vmem and N == 1 and C // tc < 2:
        two = [d for d in fitting if C // d >= 2] or [d for d in cands if C // d >= 2]
        if two:
            tc = two[0]
    return tc


# -----------------------------------------------------------------------------
# Kernel 1: regional max pooling on an (H, W, TC) channels-last block.
# -----------------------------------------------------------------------------
def _pool_kernel(x_ref, o_ref, *, regions, r_pad):
    # x_ref: (H, W, TC) in the input dtype (f32 or bf16); o_ref: (R_pad, TC) f32.
    H, W, TC = x_ref.shape
    neg = jnp.float32(-jnp.inf)
    # Sublane (W) row index, hoisted out of the region loop (no in-kernel CSE).
    col = jax.lax.broadcasted_iota(jnp.int32, (W, TC), 0)

    # Stage 1: per distinct row window (i0, hl), elementwise max over H (VPU).
    hmax = {}
    for (i0, _, hl, _) in regions:
        if (i0, hl) not in hmax:
            hmax[(i0, hl)] = jnp.max(x_ref[i0:i0 + hl], axis=0).astype(jnp.float32)

    # Stage 2: per distinct region box, masked max over the W window (sublane).
    cache = {}
    rows = []
    for box in regions:
        if box not in cache:
            i0, j0, hl, wl = box
            inwin = (col >= j0) & (col < j0 + wl)
            cache[box] = jnp.max(jnp.where(inwin, hmax[(i0, hl)], neg),
                                 axis=0, keepdims=True)          # (1, TC)
        rows.append(cache[box])

    # Zero-fill padded rows inside the same value and store once (dense store).
    rows.extend([jnp.zeros((1, TC), jnp.float32)] * (r_pad - len(rows)))
    o_ref[...] = jnp.concatenate(rows, axis=0)


# -----------------------------------------------------------------------------
# Kernel 2a: per-region L2N only (whiten=None path).  Exact division.
# -----------------------------------------------------------------------------
def _l2n_kernel(v_ref, o_ref, *, eps):
    v = v_ref[...].astype(jnp.float32)                            # (M, C)
    nrm = jnp.sqrt(jnp.sum(v * v, axis=-1, keepdims=True))
    o_ref[...] = (v / (nrm + eps)).astype(o_ref.dtype)


# -----------------------------------------------------------------------------
# Kernel 2b: L2N -> whitening Linear(C, C) on the MXU (bf16) -> L2N (exact div).
# Kernel 2 is launch/DMA-bound (M ~ 24 rows), so no matmul tuning is attempted.
# -----------------------------------------------------------------------------
def _l2n_whiten_kernel(v_ref, wt_ref, b_ref, o_ref, *, eps):
    v = v_ref[...].astype(jnp.float32)                            # (M, C)
    nrm = jnp.sqrt(jnp.sum(v * v, axis=-1, keepdims=True))
    v = v / (nrm + eps)
    # Whitening: v @ W^T + b.  bf16 operands, f32 MXU accumulation.
    y = jnp.dot(v.astype(jnp.bfloat16), wt_ref[...],
                preferred_element_type=jnp.float32) + b_ref[...]
    nrm2 = jnp.sqrt(jnp.sum(y * y, axis=-1, keepdims=True))
    o_ref[...] = (y / (nrm2 + eps)).astype(o_ref.dtype)


# -----------------------------------------------------------------------------
# Wrapper: Rpool.forward(x, aggregate=True)
# -----------------------------------------------------------------------------
def rpool_forward(x_nchw, L=3, eps=1e-6, whiten=None):
    """x_nchw: (N, C, H, W) float32 or bfloat16.

    whiten: None, or a tuple (weight (C, C), bias (C,)) of the Linear whitening.
    Returns (R, C) float32 if N == 1 (matching torch.squeeze(0)), else (N, R, C).
    """
    N, C, H, W = x_nchw.shape
    regions = _rmac_regions(H, W, L)
    R = len(regions)
    R_pad = -(-R // 8) * 8

    x = x_nchw
    if x.dtype != jnp.float32 and x.dtype != jnp.bfloat16:
        x = x.astype(jnp.float32)
    # Channels-last relayout: one XLA transpose pass over HBM so the pooling
    # kernel gets 128-dense lanes on C instead of 12-30% lane occupancy on W.
    x_nhwc = jnp.transpose(x, (0, 2, 3, 1))                       # (N, H, W, C)

    vmem_cap = _tpu_vmem_bytes()
    small_vmem = vmem_cap <= (96 << 20)                           # v7x-like (64 MiB/TC)
    itemsize = jnp.dtype(x.dtype).itemsize
    TC = _pick_c_tile(C, H, W, itemsize, N, small_vmem)
    n_c = C // TC
    vlimit = int(min((vmem_cap * 3) // 4, 100 << 20))

    # ---- Kernel 1: regional max pooling, grid over (batch, channel-chunks) ----
    pooled = pl.pallas_call(
        functools.partial(_pool_kernel, regions=regions, r_pad=R_pad),
        out_shape=jax.ShapeDtypeStruct((N, R_pad, C), jnp.float32),
        grid=(N, n_c),
        in_specs=[pl.BlockSpec((None, H, W, TC), lambda n, c: (n, 0, 0, c))],
        out_specs=pl.BlockSpec((None, R_pad, TC), lambda n, c: (n, 0, c)),
        compiler_params=pltpu.CompilerParams(
            dimension_semantics=("parallel", "parallel"),
            vmem_limit_bytes=vlimit),
    )(x_nhwc)

    pooled2d = pooled.reshape(N * R_pad, C)
    M = N * R_pad

    # ---- Kernel 2: L2N (+ optional whitening) on the tiny pooled matrix. ----
    # Grid-less call: whole operands resident once in VMEM (no double-buffered
    # copy of the (C, C) weight), which matters on v7x's 64 MiB VMEM at large C.
    if whiten is None:
        out2d = pl.pallas_call(
            functools.partial(_l2n_kernel, eps=eps),
            out_shape=jax.ShapeDtypeStruct((M, C), jnp.float32),
            compiler_params=pltpu.CompilerParams(vmem_limit_bytes=vlimit),
        )(pooled2d)
    else:
        w_lin, b_lin = whiten
        # Pre-transpose to (C_in, C_out); bf16 halves the weight's VMEM/HBM cost.
        wt = jnp.asarray(w_lin, jnp.float32).T.astype(jnp.bfloat16)
        b = jnp.asarray(b_lin, jnp.float32).reshape(1, C)
        out2d = pl.pallas_call(
            functools.partial(_l2n_whiten_kernel, eps=eps),
            out_shape=jax.ShapeDtypeStruct((M, C), jnp.float32),
            compiler_params=pltpu.CompilerParams(vmem_limit_bytes=vlimit),
        )(pooled2d, wt, b)

    out = out2d.reshape(N, R_pad, C)[:, :R, :]                    # drop padded rows
    # torch.squeeze(o, 0) / squeeze(-1) x2 -> (R, C) for N == 1.
    return out[0] if N == 1 else out
    # TODO(synk): aggregate='sum'/'gmm'/'gmp' branches (LF.gmm / LF.gmp / sklearn
    # normalize on host numpy) are CPU post-processing and are not implemented.


# -----------------------------------------------------------------------------
# Pure-JAX reference matching the PyTorch forward (aggregate=True), f32 math.
# -----------------------------------------------------------------------------
def _reference(x_nchw, L, eps, w_lin, b_lin):
    N, C, H, W = x_nchw.shape
    regions = _rmac_regions(H, W, L)
    outs = []
    for n in range(N):
        rows = [jnp.max(x_nchw[n, :, i0:i0 + hl, j0:j0 + wl], axis=(1, 2))
                for (i0, j0, hl, wl) in regions]
        pooled = jnp.stack(rows)                                   # (R, C)
        v = pooled / (jnp.sqrt(jnp.sum(pooled ** 2, -1, keepdims=True)) + eps)
        if w_lin is not None:
            y = v @ jnp.asarray(w_lin).T + jnp.asarray(b_lin)
            v = y / (jnp.sqrt(jnp.sum(y ** 2, -1, keepdims=True)) + eps)
        outs.append(v)
    out = jnp.stack(outs)
    return out[0] if N == 1 else out


if __name__ == "__main__":
    L, eps = 3, 1e-6
    key = jax.random.PRNGKey(0)
    kx, kw, kb, kx2 = jax.random.split(key, 4)

    # Whitened path (N=1, matching the module's squeeze(0) usage).
    N, C, H, W = 1, 32, 16, 16
    x = jax.random.normal(kx, (N, C, H, W), jnp.float32)
    w_lin = jax.random.normal(kw, (C, C), jnp.float32) * (1.0 / np.sqrt(C))
    b_lin = jax.random.normal(kb, (C,), jnp.float32) * 0.01

    out_w = jax.block_until_ready(rpool_forward(x, L=L, eps=eps, whiten=(w_lin, b_lin)))
    ref_w = _reference(x, L, eps, w_lin, b_lin)
    # Tolerance bounded only by the intentional bf16 MXU whitening matmul
    # (all normalizations are now exact f32 divisions).
    np.testing.assert_allclose(np.asarray(out_w), np.asarray(ref_w), rtol=2e-2, atol=5e-3)

    # whiten=None path: exact max pooling + exact f32 L2N.
    out_n = jax.block_until_ready(rpool_forward(x, L=L, eps=eps, whiten=None))
    ref_n = _reference(x, L, eps, None, None)
    np.testing.assert_allclose(np.asarray(out_n), np.asarray(ref_n), rtol=1e-4, atol=1e-6)

    # Batched path (N=2, C=4) exercising the (parallel, parallel) grid.
    x2 = jax.random.normal(kx2, (2, 4, 16, 16), jnp.float32)
    out_b = jax.block_until_ready(rpool_forward(x2, L=L, eps=eps, whiten=None))
    ref_b = _reference(x2, L, eps, None, None)
    np.testing.assert_allclose(np.asarray(out_b), np.asarray(ref_b), rtol=1e-4, atol=1e-6)

    # bf16 input path: pooling keeps bf16 HBM/VMEM traffic; max is exact in bf16.
    xb = x.astype(jnp.bfloat16)
    out_bf = jax.block_until_ready(rpool_forward(xb, L=L, eps=eps, whiten=None))
    ref_bf = _reference(xb.astype(jnp.float32), L, eps, None, None)
    np.testing.assert_allclose(np.asarray(out_bf), np.asarray(ref_bf), rtol=1e-4, atol=1e-6)

    print("KERNEL_OK")
</pallas_src>

<mosaic_0001>
module attributes {stable_mosaic.version = 11 : i64} {
  func.func @_pool_kernel(%arg0: i32, %arg1: i32, %arg2: memref<1x16x16x32xf32, #tpu.memory_space<vmem>>, %arg3: memref<1x16x32xf32, #tpu.memory_space<vmem>>) attributes {dimension_semantics = [#tpu.dimension_semantics<parallel>, #tpu.dimension_semantics<parallel>], iteration_bounds = array<i64: 1, 1>, scalar_prefetch = 0 : i64, scratch_operands = 0 : i64, tpu.core_type = #tpu.core_type<tc>, window_params = [{transform_indices = @transform_0, window_bounds = array<i64: 1, 16, 16, 32>}, {transform_indices = @transform_1, window_bounds = array<i64: 1, 16, 32>}]} {
    %0 = tpu.iota {dimensions = array<i32: 0>} : vector<16x32xi32>
    %c0 = arith.constant 0 : index
    %c0_0 = arith.constant 0 : index
    %c0_1 = arith.constant 0 : index
    %c0_2 = arith.constant 0 : index
    %1 = vector.load %arg2[%c0, %c0_0, %c0_1, %c0_2] : memref<1x16x16x32xf32, #tpu.memory_space<vmem>>, vector<1x16x16x32xf32>
    %2 = vector.shape_cast %1 : vector<1x16x16x32xf32> to vector<16x16x32xf32>
    %cst = arith.constant dense<0xFF800000> : vector<16x32xf32>
    %3 = vector.multi_reduction <maximumf>, %2, %cst [0] : vector<16x16x32xf32> to vector<16x32xf32>
    %c0_3 = arith.constant 0 : index
    %c0_4 = arith.constant 0 : index
    %c0_5 = arith.constant 0 : index
    %c0_6 = arith.constant 0 : index
    %4 = vector.load %arg2[%c0_3, %c0_4, %c0_5, %c0_6] : memref<1x16x16x32xf32, #tpu.memory_space<vmem>>, vector<1x10x16x32xf32>
    %5 = vector.shape_cast %4 : vector<1x10x16x32xf32> to vector<10x16x32xf32>
    %cst_7 = arith.constant dense<0xFF800000> : vector<16x32xf32>
    %6 = vector.multi_reduction <maximumf>, %5, %cst_7 [0] : vector<10x16x32xf32> to vector<16x32xf32>
    %c0_8 = arith.constant 0 : index
    %c6 = arith.constant 6 : index
    %c0_9 = arith.constant 0 : index
    %c0_10 = arith.constant 0 : index
    %7 = vector.load %arg2[%c0_8, %c6, %c0_9, %c0_10] : memref<1x16x16x32xf32, #tpu.memory_space<vmem>>, vector<1x10x16x32xf32>
    %8 = vector.shape_cast %7 : vector<1x10x16x32xf32> to vector<10x16x32xf32>
    %cst_11 = arith.constant dense<0xFF800000> : vector<16x32xf32>
    %9 = vector.multi_reduction <maximumf>, %8, %cst_11 [0] : vector<10x16x32xf32> to vector<16x32xf32>
    %c0_12 = arith.constant 0 : index
    %c0_13 = arith.constant 0 : index
    %c0_14 = arith.constant 0 : index
    %c0_15 = arith.constant 0 : index
    %10 = vector.load %arg2[%c0_12, %c0_13, %c0_14, %c0_15] : memref<1x16x16x32xf32, #tpu.memory_space<vmem>>, vector<1x8x16x32xf32>
    %11 = vector.shape_cast %10 : vector<1x8x16x32xf32> to vector<8x16x32xf32>
    %cst_16 = arith.constant dense<0xFF800000> : vector<16x32xf32>
    %12 = vector.multi_reduction <maximumf>, %11, %cst_16 [0] : vector<8x16x32xf32> to vector<16x32xf32>
    %c0_17 = arith.constant 0 : index
    %c4 = arith.constant 4 : index
    %c0_18 = arith.constant 0 : index
    %c0_19 = arith.constant 0 : index
    %13 = vector.load %arg2[%c0_17, %c4, %c0_18, %c0_19] : memref<1x16x16x32xf32, #tpu.memory_space<vmem>>, vector<1x8x16x32xf32>
    %14 = vector.shape_cast %13 : vector<1x8x16x32xf32> to vector<8x16x32xf32>
    %cst_20 = arith.constant dense<0xFF800000> : vector<16x32xf32>
    %15 = vector.multi_reduction <maximumf>, %14, %cst_20 [0] : vector<8x16x32xf32> to vector<16x32xf32>
    %c0_21 = arith.constant 0 : index
    %c8 = arith.constant 8 : index
    %c0_22 = arith.constant 0 : index
    %c0_23 = arith.constant 0 : index
    %16 = vector.load %arg2[%c0_21, %c8, %c0_22, %c0_23] : memref<1x16x16x32xf32, #tpu.memory_space<vmem>>, vector<1x8x16x32xf32>
    %17 = vector.shape_cast %16 : vector<1x8x16x32xf32> to vector<8x16x32xf32>
    %cst_24 = arith.constant dense<0xFF800000> : vector<16x32xf32>
    %18 = vector.multi_reduction <maximumf>, %17, %cst_24 [0] : vector<8x16x32xf32> to vector<16x32xf32>
    %c0_i32 = arith.constant 0 : i32
    %19 = vector.broadcast %c0_i32 : i32 to vector<16x32xi32>
    %20 = arith.cmpi sge, %0, %19 : vector<16x32xi32>
    %c16_i32 = arith.constant 16 : i32
    %21 = vector.broadcast %c16_i32 : i32 to vector<16x32xi32>
    %22 = arith.cmpi slt, %0, %21 : vector<16x32xi32>
    %23 = arith.andi %20, %22 : vector<16x32xi1>
    %cst_25 = arith.constant 0xFF800000 : f32
    %24 = vector.broadcast %cst_25 : f32 to vector<16x32xf32>
    %25 = arith.select %23, %3, %24 : vector<16x32xi1>, vector<16x32xf32>
    %cst_26 = arith.constant dense<0xFF800000> : vector<32xf32>
    %26 = vector.multi_reduction <maximumf>, %25, %cst_26 [0] : vector<16x32xf32> to vector<32xf32>
    %27 = vector.shape_cast %26 : vector<32xf32> to vector<1x32xf32>
    %c0_i32_27 = arith.constant 0 : i32
    %28 = vector.broadcast %c0_i32_27 : i32 to vector<16x32xi32>
    %29 = arith.cmpi sge, %0, %28 : vector<16x32xi32>
    %c10_i32 = arith.constant 10 : i32
    %30 = vector.broadcast %c10_i32 : i32 to vector<16x32xi32>
    %31 = arith.cmpi slt, %0, %30 : vector<16x32xi32>
    %32 = arith.andi %29, %31 : vector<16x32xi1>
    %cst_28 = arith.constant 0xFF800000 : f32
    %33 = vector.broadcast %cst_28 : f32 to vector<16x32xf32>
    %34 = arith.select %32, %6, %33 : vector<16x32xi1>, vector<16x32xf32>
    %cst_29 = arith.constant dense<0xFF800000> : vector<32xf32>
    %35 = vector.multi_reduction <maximumf>, %34, %cst_29 [0] : vector<16x32xf32> to vector<32xf32>
    %36 = vector.shape_cast %35 : vector<32xf32> to vector<1x32xf32>
    %c6_i32 = arith.constant 6 : i32
    %37 = vector.broadcast %c6_i32 : i32 to vector<16x32xi32>
    %38 = arith.cmpi sge, %0, %37 : vector<16x32xi32>
    %c16_i32_30 = arith.constant 16 : i32
    %39 = vector.broadcast %c16_i32_30 : i32 to vector<16x32xi32>
    %40 = arith.cmpi slt, %0, %39 : vector<16x32xi32>
    %41 = arith.andi %38, %40 : vector<16x32xi1>
    %cst_31 = arith.constant 0xFF800000 : f32
    %42 = vector.broadcast %cst_31 : f32 to vector<16x32xf32>
    %43 = arith.select %41, %6, %42 : vector<16x32xi1>, vector<16x32xf32>
    %cst_32 = arith.constant dense<0xFF800000> : vector<32xf32>
    %44 = vector.multi_reduction <maximumf>, %43, %cst_32 [0] : vector<16x32xf32> to vector<32xf32>
    %45 = vector.shape_cast %44 : vector<32xf32> to vector<1x32xf32>
    %c0_i32_33 = arith.constant 0 : i32
    %46 = vector.broadcast %c0_i32_33 : i32 to vector<16x32xi32>
    %47 = arith.cmpi sge, %0, %46 : vector<16x32xi32>
    %c10_i32_34 = arith.constant 10 : i32
    %48 = vector.broadcast %c10_i32_34 : i32 to vector<16x32xi32>
    %49 = arith.cmpi slt, %0, %48 : vector<16x32xi32>
    %50 = arith.andi %47, %49 : vector<16x32xi1>
    %cst_35 = arith.constant 0xFF800000 : f32
    %51 = vector.broadcast %cst_35 : f32 to vector<16x32xf32>
    %52 = arith.select %50, %9, %51 : vector<16x32xi1>, vector<16x32xf32>
    %cst_36 = arith.constant dense<0xFF800000> : vector<32xf32>
    %53 = vector.multi_reduction <maximumf>, %52, %cst_36 [0] : vector<16x32xf32> to vector<32xf32>
    %54 = vector.shape_cast %53 : vector<32xf32> to vector<1x32xf32>
    %c6_i32_37 = arith.constant 6 : i32
    %55 = vector.broadcast %c6_i32_37 : i32 to vector<16x32xi32>
    %56 = arith.cmpi sge, %0, %55 : vector<16x32xi32>
    %c16_i32_38 = arith.constant 16 : i32
    %57 = vector.broadcast %c16_i32_38 : i32 to vector<16x32xi32>
    %58 = arith.cmpi slt, %0, %57 : vector<16x32xi32>
    %59 = arith.andi %56, %58 : vector<16x32xi1>
    %cst_39 = arith.constant 0xFF800000 : f32
    %60 = vector.broadcast %cst_39 : f32 to vector<16x32xf32>
    %61 = arith.select %59, %9, %60 : vector<16x32xi1>, vector<16x32xf32>
    %cst_40 = arith.constant dense<0xFF800000> : vector<32xf32>
    %62 = vector.multi_reduction <maximumf>, %61, %cst_40 [0] : vector<16x32xf32> to vector<32xf32>
    %63 = vector.shape_cast %62 : vector<32xf32> to vector<1x32xf32>
    %c0_i32_41 = arith.constant 0 : i32
    %64 = vector.broadcast %c0_i32_41 : i32 to vector<16x32xi32>
    %65 = arith.cmpi sge, %0, %64 : vector<16x32xi32>
    %c8_i32 = arith.constant 8 : i32
    %66 = vector.broadcast %c8_i32 : i32 to vector<16x32xi32>
    %67 = arith.cmpi slt, %0, %66 : vector<16x32xi32>
    %68 = arith.andi %65, %67 : vector<16x32xi1>
    %cst_42 = arith.constant 0xFF800000 : f32
    %69 = vector.broadcast %cst_42 : f32 to vector<16x32xf32>
    %70 = arith.select %68, %12, %69 : vector<16x32xi1>, vector<16x32xf32>
    %cst_43 = arith.constant dense<0xFF800000> : vector<32xf32>
    %71 = vector.multi_reduction <maximumf>, %70, %cst_43 [0] : vector<16x32xf32> to vector<32xf32>
    %72 = vector.shape_cast %71 : vector<32xf32> to vector<1x32xf32>
    %c4_i32 = arith.constant 4 : i32
    %73 = vector.broadcast %c4_i32 : i32 to vector<16x32xi32>
    %74 = arith.cmpi sge, %0, %73 : vector<16x32xi32>
    %c12_i32 = arith.constant 12 : i32
    %75 = vector.broadcast %c12_i32 : i32 to vector<16x32xi32>
    %76 = arith.cmpi slt, %0, %75 : vector<16x32xi32>
    %77 = arith.andi %74, %76 : vector<16x32xi1>
    %cst_44 = arith.constant 0xFF800000 : f32
    %78 = vector.broadcast %cst_44 : f32 to vector<16x32xf32>
    %79 = arith.select %77, %12, %78 : vector<16x32xi1>, vector<16x32xf32>
    %cst_45 = arith.constant dense<0xFF800000> : vector<32xf32>
    %80 = vector.multi_reduction <maximumf>, %79, %cst_45 [0] : vector<16x32xf32> to vector<32xf32>
    %81 = vector.shape_cast %80 : vector<32xf32> to vector<1x32xf32>
    %c8_i32_46 = arith.constant 8 : i32
    %82 = vector.broadcast %c8_i32_46 : i32 to vector<16x32xi32>
    %83 = arith.cmpi sge, %0, %82 : vector<16x32xi32>
    %c16_i32_47 = arith.constant 16 : i32
    %84 = vector.broadcast %c16_i32_47 : i32 to vector<16x32xi32>
    %85 = arith.cmpi slt, %0, %84 : vector<16x32xi32>
    %86 = arith.andi %83, %85 : vector<16x32xi1>
    %cst_48 = arith.constant 0xFF800000 : f32
    %87 = vector.broadcast %cst_48 : f32 to vector<16x32xf32>
    %88 = arith.select %86, %12, %87 : vector<16x32xi1>, vector<16x32xf32>
    %cst_49 = arith.constant dense<0xFF800000> : vector<32xf32>
    %89 = vector.multi_reduction <maximumf>, %88, %cst_49 [0] : vector<16x32xf32> to vector<32xf32>
    %90 = vector.shape_cast %89 : vector<32xf32> to vector<1x32xf32>
    %c0_i32_50 = arith.constant 0 : i32
    %91 = vector.broadcast %c0_i32_50 : i32 to vector<16x32xi32>
    %92 = arith.cmpi sge, %0, %91 : vector<16x32xi32>
    %c8_i32_51 = arith.constant 8 : i32
    %93 = vector.broadcast %c8_i32_51 : i32 to vector<16x32xi32>
    %94 = arith.cmpi slt, %0, %93 : vector<16x32xi32>
    %95 = arith.andi %92, %94 : vector<16x32xi1>
    %cst_52 = arith.constant 0xFF800000 : f32
    %96 = vector.broadcast %cst_52 : f32 to vector<16x32xf32>
    %97 = arith.select %95, %15, %96 : vector<16x32xi1>, vector<16x32xf32>
    %cst_53 = arith.constant dense<0xFF800000> : vector<32xf32>
    %98 = vector.multi_reduction <maximumf>, %97, %cst_53 [0] : vector<16x32xf32> to vector<32xf32>
    %99 = vector.shape_cast %98 : vector<32xf32> to vector<1x32xf32>
    %c4_i32_54 = arith.constant 4 : i32
    %100 = vector.broadcast %c4_i32_54 : i32 to vector<16x32xi32>
    %101 = arith.cmpi sge, %0, %100 : vector<16x32xi32>
    %c12_i32_55 = arith.constant 12 : i32
    %102 = vector.broadcast %c12_i32_55 : i32 to vector<16x32xi32>
    %103 = arith.cmpi slt, %0, %102 : vector<16x32xi32>
    %104 = arith.andi %101, %103 : vector<16x32xi1>
    %cst_56 = arith.constant 0xFF800000 : f32
    %105 = vector.broadcast %cst_56 : f32 to vector<16x32xf32>
    %106 = arith.select %104, %15, %105 : vector<16x32xi1>, vector<16x32xf32>
    %cst_57 = arith.constant dense<0xFF800000> : vector<32xf32>
    %107 = vector.multi_reduction <maximumf>, %106, %cst_57 [0] : vector<16x32xf32> to vector<32xf32>
    %108 = vector.shape_cast %107 : vector<32xf32> to vector<1x32xf32>
    %c8_i32_58 = arith.constant 8 : i32
    %109 = vector.broadcast %c8_i32_58 : i32 to vector<16x32xi32>
    %110 = arith.cmpi sge, %0, %109 : vector<16x32xi32>
    %c16_i32_59 = arith.constant 16 : i32
    %111 = vector.broadcast %c16_i32_59 : i32 to vector<16x32xi32>
    %112 = arith.cmpi slt, %0, %111 : vector<16x32xi32>
    %113 = arith.andi %110, %112 : vector<16x32xi1>
    %cst_60 = arith.constant 0xFF800000 : f32
    %114 = vector.broadcast %cst_60 : f32 to vector<16x32xf32>
    %115 = arith.select %113, %15, %114 : vector<16x32xi1>, vector<16x32xf32>
    %cst_61 = arith.constant dense<0xFF800000> : vector<32xf32>
    %116 = vector.multi_reduction <maximumf>, %115, %cst_61 [0] : vector<16x32xf32> to vector<32xf32>
    %117 = vector.shape_cast %116 : vector<32xf32> to vector<1x32xf32>
    %c0_i32_62 = arith.constant 0 : i32
    %118 = vector.broadcast %c0_i32_62 : i32 to vector<16x32xi32>
    %119 = arith.cmpi sge, %0, %118 : vector<16x32xi32>
    %c8_i32_63 = arith.constant 8 : i32
    %120 = vector.broadcast %c8_i32_63 : i32 to vector<16x32xi32>
    %121 = arith.cmpi slt, %0, %120 : vector<16x32xi32>
    %122 = arith.andi %119, %121 : vector<16x32xi1>
    %cst_64 = arith.constant 0xFF800000 : f32
    %123 = vector.broadcast %cst_64 : f32 to vector<16x32xf32>
    %124 = arith.select %122, %18, %123 : vector<16x32xi1>, vector<16x32xf32>
    %cst_65 = arith.constant dense<0xFF800000> : vector<32xf32>
    %125 = vector.multi_reduction <maximumf>, %124, %cst_65 [0] : vector<16x32xf32> to vector<32xf32>
    %126 = vector.shape_cast %125 : vector<32xf32> to vector<1x32xf32>
    %c4_i32_66 = arith.constant 4 : i32
    %127 = vector.broadcast %c4_i32_66 : i32 to vector<16x32xi32>
    %128 = arith.cmpi sge, %0, %127 : vector<16x32xi32>
    %c12_i32_67 = arith.constant 12 : i32
    %129 = vector.broadcast %c12_i32_67 : i32 to vector<16x32xi32>
    %130 = arith.cmpi slt, %0, %129 : vector<16x32xi32>
    %131 = arith.andi %128, %130 : vector<16x32xi1>
    %cst_68 = arith.constant 0xFF800000 : f32
    %132 = vector.broadcast %cst_68 : f32 to vector<16x32xf32>
    %133 = arith.select %131, %18, %132 : vector<16x32xi1>, vector<16x32xf32>
    %cst_69 = arith.constant dense<0xFF800000> : vector<32xf32>
    %134 = vector.multi_reduction <maximumf>, %133, %cst_69 [0] : vector<16x32xf32> to vector<32xf32>
    %135 = vector.shape_cast %134 : vector<32xf32> to vector<1x32xf32>
    %c8_i32_70 = arith.constant 8 : i32
    %136 = vector.broadcast %c8_i32_70 : i32 to vector<16x32xi32>
    %137 = arith.cmpi sge, %0, %136 : vector<16x32xi32>
    %c16_i32_71 = arith.constant 16 : i32
    %138 = vector.broadcast %c16_i32_71 : i32 to vector<16x32xi32>
    %139 = arith.cmpi slt, %0, %138 : vector<16x32xi32>
    %140 = arith.andi %137, %139 : vector<16x32xi1>
    %cst_72 = arith.constant 0xFF800000 : f32
    %141 = vector.broadcast %cst_72 : f32 to vector<16x32xf32>
    %142 = arith.select %140, %18, %141 : vector<16x32xi1>, vector<16x32xf32>
    %cst_73 = arith.constant dense<0xFF800000> : vector<32xf32>
    %143 = vector.multi_reduction <maximumf>, %142, %cst_73 [0] : vector<16x32xf32> to vector<32xf32>
    %144 = vector.shape_cast %143 : vector<32xf32> to vector<1x32xf32>
    %cst_74 = arith.constant 0.000000e+00 : f32
    %145 = vector.broadcast %cst_74 : f32 to vector<1x32xf32>
    %146 = tpu.concatenate %27, %27, %36, %45, %54, %63, %72, %81, %90, %99, %108, %117, %126, %135, %144, %145 in 0 : vector<1x32xf32>, vector<1x32xf32>, vector<1x32xf32>, vector<1x32xf32>, vector<1x32xf32>, vector<1x32xf32>, vector<1x32xf32>, vector<1x32xf32>, vector<1x32xf32>, vector<1x32xf32>, vector<1x32xf32>, vector<1x32xf32>, vector<1x32xf32>, vector<1x32xf32>, vector<1x32xf32>, vector<1x32xf32> -> vector<16x32xf32>
    %c0_75 = arith.constant 0 : index
    %c0_76 = arith.constant 0 : index
    %c0_77 = arith.constant 0 : index
    %147 = vector.load %arg3[%c0_75, %c0_76, %c0_77] : memref<1x16x32xf32, #tpu.memory_space<vmem>>, vector<1x16x32xf32>
    %148 = vector.shape_cast %147 : vector<1x16x32xf32> to vector<16x32xf32>
    %149 = vector.shape_cast %146 : vector<16x32xf32> to vector<1x16x32xf32>
    tpu.vector_store %arg3[%c0_75, %c0_76, %c0_77], %149 {strides = array<i32>} : memref<1x16x32xf32, #tpu.memory_space<vmem>>, vector<1x16x32xf32>,
    return
  }
  func.func @transform_0(%arg0: i32, %arg1: i32) -> (i32, i32, i32, i32) {
    %c0_i32 = arith.constant 0 : i32
    %c0_i32_0 = arith.constant 0 : i32
    %c0_i32_1 = arith.constant 0 : i32
    return %arg0, %c0_i32, %c0_i32_0, %arg1 : i32, i32, i32, i32
  }
  func.func @transform_1(%arg0: i32, %arg1: i32) -> (i32, i32, i32) {
    %c0_i32 = arith.constant 0 : i32
    %c0_i32_0 = arith.constant 0 : i32
    return %arg0, %c0_i32, %arg1 : i32, i32, i32
  }
}

</mosaic_0001>

<llo_original>
// kernel: tpu_custom_call.1
$region0: #{tpu_custom_call.1}
  #allocation0 [shape = 'u32[]', space=smem, size = 0x4, offset = 0x4, fixed_abs, tag = 'smem constant byte address 0x4 - core index']
  #allocation1 [shape = 'u32[144,128]{1,0:T(1,128)}', space=vmem, size = 0x12000, scoped, tag = 'internal scratch']
  %s0 = inlined_call_operand.hbm [shape: f32[1,16,16,32], index: 0, kind: input, shape index: {}]
  %s1 = inlined_call_operand.hbm [shape: f32[1,16,32], index: 1, kind: output, shape index: {}]
  %s2 = sld [smem:[#allocation0]]
  $region18: #{tpu_custom_call.1} parent=0
    _
  %s4 = ssub.s32 1, %s2
  %s5 = scalar_select 0, %s4, %s2
  $region1: #{tpu_custom_call.1} parent=0
    #allocation2 [shape = 'u8[131072]{0}', space=vmem, size = 0x20000, scoped, tag = 'input window, operand 0, single buffered']
    #allocation3 [shape = 's32[1]{0}', space=sflag, size = 0x4, scoped, tag = 'scoped memory for tpu_custom_call.1']
    #allocation4 [shape = 's32[1]{0}', space=sflag, size = 0x4, scoped, tag = 'scoped memory for tpu_custom_call.1']
    #allocation5 [shape = 'u8[8192]{0}', space=vmem, size = 0x2000, scoped, tag = 'output window, operand 0, single buffered']
    %6 = vsyncpa [#allocation3], 0
    %7 = vsyncpa [#allocation4], 0
    // Predicated region
    $region2: #{tpu_custom_call.1} parent=1 // pred_check
      _
    $region3: #{tpu_custom_call.1} parent=1 // pred_check_branch
      %9 = sbr.rel (0) target = $region5
    $region4: #{tpu_custom_call.1} parent=1 // pred_region
      %s11 = ssub.s32 4096, 4096
      %12 = vsyncadd [#allocation3], %s11
      %s13 = sshll.u32 [#allocation2], 4
      %s14 = int_to_ptr.vmem [resolvable:$true] %s13
      %19 = dma.hbm_to_vmem [thread:$0]  %s0, 4096, %s14, [#allocation3], 128, 128, 8
    $region5: #{tpu_custom_call.1} parent=1 // pred_fallthru
      _
    // Predicated region
    $region6: #{tpu_custom_call.1} parent=1 // pred_check
      _
    $region7: #{tpu_custom_call.1} parent=1 // pred_check_branch
      %21 = sbr.rel (0) target = $region9
    $region8: #{tpu_custom_call.1} parent=1 // pred_region
      %22 = dma.done [#allocation3], 4096
    $region9: #{tpu_custom_call.1} parent=1 // pred_fallthru
      _
    %v23 = vlaneseq
    %v24 = vshrl.u32 %v23, 7
    %v25 = vadd.s32 %v24, 8
    %v26 = vld [vmem:[#allocation2] sm:$0xff]
    %v27 = vld [vmem:[#allocation2 + $0x8] sm:$0xff]
    %v28 = vld [vmem:[#allocation2 + $0x10] sm:$0xff]
    %v29 = vld [vmem:[#allocation2 + $0x18] sm:$0xff]
    %v30 = vld [vmem:[#allocation2 + $0x20] sm:$0xff]
    %v31 = vld [vmem:[#allocation2 + $0x28] sm:$0xff]
    %v32 = vld [vmem:[#allocation2 + $0x30] sm:$0xff]
    %v33 = vld [vmem:[#allocation2 + $0x38] sm:$0xff]
    %v34 = vld [vmem:[#allocation2 + $0x40] sm:$0xff]
    %v35 = vld [vmem:[#allocation2 + $0x48] sm:$0xff]
    %v36 = vld [vmem:[#allocation2 + $0x50] sm:$0xff]
    %v37 = vld [vmem:[#allocation2 + $0x58] sm:$0xff]
    %v38 = vld [vmem:[#allocation2 + $0x60] sm:$0xff]
    %v39 = vld [vmem:[#allocation2 + $0x68] sm:$0xff]
    %v40 = vld [vmem:[#allocation2 + $0x70] sm:$0xff]
    %v41 = vld [vmem:[#allocation2 + $0x78] sm:$0xff]
    %v42 = vld [vmem:[#allocation2 + $0x80] sm:$0xff]
    %v43 = vld [vmem:[#allocation2 + $0x88] sm:$0xff]
    %v44 = vld [vmem:[#allocation2 + $0x90] sm:$0xff]
    %v45 = vld [vmem:[#allocation2 + $0x98] sm:$0xff]
    %v46 = vld [vmem:[#allocation2 + $0xa0] sm:$0xff]
    %v47 = vld [vmem:[#allocation2 + $0xa8] sm:$0xff]
    %v48 = vld [vmem:[#allocation2 + $0xb0] sm:$0xff]
    %v49 = vld [vmem:[#allocation2 + $0xb8] sm:$0xff]
    %v50 = vld [vmem:[#allocation2 + $0xc0] sm:$0xff]
    %v51 = vld [vmem:[#allocation2 + $0xc8] sm:$0xff]
    %v52 = vld [vmem:[#allocation2 + $0xd0] sm:$0xff]
    %v53 = vld [vmem:[#allocation2 + $0xd8] sm:$0xff]
    %v54 = vld [vmem:[#allocation2 + $0xe0] sm:$0xff]
    %v55 = vld [vmem:[#allocation2 + $0xe8] sm:$0xff]
    %v56 = vld [vmem:[#allocation2 + $0xf0] sm:$0xff]
    %v57 = vld [vmem:[#allocation2 + $0xf8] sm:$0xff]
    %vm58 = vcmask 261120
    %v59 = vsel %vm58, %v26, -inf
    %v60 = vsel %vm58, %v28, -inf
    %v61 = vsel %vm58, %v30, -inf
    %v62 = vmax.f32 %v59, %v61
    %v63 = vsel %vm58, %v32, -inf
    %v64 = vmax.f32 %v60, %v63
    %v65 = vsel %vm58, %v34, -inf
    %v66 = vmax.f32 %v62, %v65
    %v67 = vsel %vm58, %v36, -inf
    %v68 = vmax.f32 %v64, %v67
    %v69 = vsel %vm58, %v38, -inf
    %v70 = vmax.f32 %v66, %v69
    %v71 = vsel %vm58, %v40, -inf
    %v72 = vmax.f32 %v68, %v71
    %v73 = vsel %vm58, %v42, -inf
    %v74 = vmax.f32 %v70, %v73
    %v75 = vsel %vm58, %v44, -inf
    %v76 = vmax.f32 %v72, %v75
    %v77 = vsel %vm58, %v46, -inf
    %v78 = vmax.f32 %v74, %v77
    %v79 = vsel %vm58, %v48, -inf
    %v80 = vmax.f32 %v76, %v79
    %v81 = vsel %vm58, %v50, -inf
    %v82 = vmax.f32 %v78, %v81
    %v83 = vsel %vm58, %v52, -inf
    %v84 = vmax.f32 %v80, %v83
    %v85 = vsel %vm58, %v54, -inf
    %v86 = vmax.f32 %v82, %v85
    %v87 = vsel %vm58, %v56, -inf
    %v88 = vmax.f32 %v84, %v87
    %v89 = vmax.f32 %v86, %v88
    %v90 = vsel %vm58, %v27, -inf
    %v91 = vsel %vm58, %v29, -inf
    %v92 = vsel %vm58, %v31, -inf
    %v93 = vmax.f32 %v90, %v92
    %v94 = vsel %vm58, %v33, -inf
    %v95 = vmax.f32 %v91, %v94
    %v96 = vsel %vm58, %v35, -inf
    %v97 = vmax.f32 %v93, %v96
    %v98 = vsel %vm58, %v37, -inf
    %v99 = vmax.f32 %v95, %v98
    %v100 = vsel %vm58, %v39, -inf
    %v101 = vmax.f32 %v97, %v100
    %v102 = vsel %vm58, %v41, -inf
    %v103 = vmax.f32 %v99, %v102
    %v104 = vsel %vm58, %v43, -inf
    %v105 = vmax.f32 %v101, %v104
    %v106 = vsel %vm58, %v45, -inf
    %v107 = vmax.f32 %v103, %v106
    %v108 = vsel %vm58, %v47, -inf
    %v109 = vmax.f32 %v105, %v108
    %v110 = vsel %vm58, %v49, -inf
    %v111 = vmax.f32 %v107, %v110
    %v112 = vsel %vm58, %v51, -inf
    %v113 = vmax.f32 %v109, %v112
    %v114 = vsel %vm58, %v53, -inf
    %v115 = vmax.f32 %v111, %v114
    %v116 = vsel %vm58, %v55, -inf
    %v117 = vmax.f32 %v113, %v116
    %v118 = vsel %vm58, %v57, -inf
    %v119 = vmax.f32 %v115, %v118
    %v120 = vmax.f32 %v117, %v119
    %v121 = vmax.f32 %v74, %v76
    %v122 = vmax.f32 %v105, %v107
    %s123 = scalar_lea.vmem [#allocation2], 96
    %v124 = vld [vmem:[%s123] sm:$0xff]
    %v125 = vld [vmem:[%s123 + $0x8] sm:$0xff]
    %v126 = vld [vmem:[%s123 + $0x10] sm:$0xff]
    %v127 = vld [vmem:[%s123 + $0x18] sm:$0xff]
    %v128 = vld [vmem:[%s123 + $0x20] sm:$0xff]
    %v129 = vld [vmem:[%s123 + $0x28] sm:$0xff]
    %v130 = vld [vmem:[%s123 + $0x30] sm:$0xff]
    %v131 = vld [vmem:[%s123 + $0x38] sm:$0xff]
    %v132 = vld [vmem:[%s123 + $0x40] sm:$0xff]
    %v133 = vld [vmem:[%s123 + $0x48] sm:$0xff]
    %v134 = vld [vmem:[%s123 + $0x50] sm:$0xff]
    %v135 = vld [vmem:[%s123 + $0x58] sm:$0xff]
    %v136 = vld [vmem:[%s123 + $0x60] sm:$0xff]
    %v137 = vld [vmem:[%s123 + $0x68] sm:$0xff]
    %v138 = vld [vmem:[%s123 + $0x70] sm:$0xff]
    %v139 = vld [vmem:[%s123 + $0x78] sm:$0xff]
    %v140 = vld [vmem:[%s123 + $0x80] sm:$0xff]
    %v141 = vld [vmem:[%s123 + $0x88] sm:$0xff]
    %v142 = vld [vmem:[%s123 + $0x90] sm:$0xff]
    %v143 = vld [vmem:[%s123 + $0x98] sm:$0xff]
    %v144 = vsel %vm58, %v124, -inf
    %v145 = vsel %vm58, %v126, -inf
    %v146 = vsel %vm58, %v128, -inf
    %v147 = vmax.f32 %v144, %v146
    %v148 = vsel %vm58, %v130, -inf
    %v149 = vmax.f32 %v145, %v148
    %v150 = vsel %vm58, %v132, -inf
    %v151 = vmax.f32 %v147, %v150
    %v152 = vsel %vm58, %v134, -inf
    %v153 = vmax.f32 %v149, %v152
    %v154 = vsel %vm58, %v136, -inf
    %v155 = vmax.f32 %v151, %v154
    %v156 = vsel %vm58, %v138, -inf
    %v157 = vmax.f32 %v153, %v156
    %v158 = vsel %vm58, %v140, -inf
    %v159 = vmax.f32 %v155, %v158
    %v160 = vsel %vm58, %v142, -inf
    %v161 = vmax.f32 %v157, %v160
    %v162 = vmax.f32 %v159, %v161
    %v163 = vsel %vm58, %v125, -inf
    %v164 = vsel %vm58, %v127, -inf
    %v165 = vsel %vm58, %v129, -inf
    %v166 = vmax.f32 %v163, %v165
    %v167 = vsel %vm58, %v131, -inf
    %v168 = vmax.f32 %v164, %v167
    %v169 = vsel %vm58, %v133, -inf
    %v170 = vmax.f32 %v166, %v169
    %v171 = vsel %vm58, %v135, -inf
    %v172 = vmax.f32 %v168, %v171
    %v173 = vsel %vm58, %v137, -inf
    %v174 = vmax.f32 %v170, %v173
    %v175 = vsel %vm58, %v139, -inf
    %v176 = vmax.f32 %v172, %v175
    %v177 = vsel %vm58, %v141, -inf
    %v178 = vmax.f32 %v174, %v177
    %v179 = vsel %vm58, %v143, -inf
    %v180 = vmax.f32 %v176, %v179
    %v181 = vmax.f32 %v178, %v180
    %v182 = vmax.f32 %v70, %v72
    %v183 = vmax.f32 %v101, %v103
    %s184 = scalar_lea.vmem [#allocation2], 64
    %v185 = vld [vmem:[%s184] sm:$0xff]
    %v186 = vld [vmem:[%s184 + $0x8] sm:$0xff]
    %v187 = vld [vmem:[%s184 + $0x10] sm:$0xff]
    %v188 = vld [vmem:[%s184 + $0x18] sm:$0xff]
    %v189 = vld [vmem:[%s184 + $0x20] sm:$0xff]
    %v190 = vld [vmem:[%s184 + $0x28] sm:$0xff]
    %v191 = vld [vmem:[%s184 + $0x30] sm:$0xff]
    %v192 = vld [vmem:[%s184 + $0x38] sm:$0xff]
    %v193 = vld [vmem:[%s184 + $0x40] sm:$0xff]
    %v194 = vld [vmem:[%s184 + $0x48] sm:$0xff]
    %v195 = vld [vmem:[%s184 + $0x50] sm:$0xff]
    %v196 = vld [vmem:[%s184 + $0x58] sm:$0xff]
    %v197 = vld [vmem:[%s184 + $0x60] sm:$0xff]
    %v198 = vld [vmem:[%s184 + $0x68] sm:$0xff]
    %v199 = vld [vmem:[%s184 + $0x70] sm:$0xff]
    %v200 = vld [vmem:[%s184 + $0x78] sm:$0xff]
    %v201 = vsel %vm58, %v185, -inf
    %v202 = vsel %vm58, %v187, -inf
    %v203 = vsel %vm58, %v189, -inf
    %v204 = vmax.f32 %v201, %v203
    %v205 = vsel %vm58, %v191, -inf
    %v206 = vmax.f32 %v202, %v205
    %v207 = vsel %vm58, %v193, -inf
    %v208 = vmax.f32 %v204, %v207
    %v209 = vsel %vm58, %v195, -inf
    %v210 = vmax.f32 %v206, %v209
    %v211 = vsel %vm58, %v197, -inf
    %v212 = vmax.f32 %v208, %v211
    %v213 = vsel %vm58, %v199, -inf
    %v214 = vmax.f32 %v210, %v213
    %v215 = vmax.f32 %v212, %v214
    %v216 = vsel %vm58, %v186, -inf
    %v217 = vsel %vm58, %v188, -inf
    %v218 = vsel %vm58, %v190, -inf
    %v219 = vmax.f32 %v216, %v218
    %v220 = vsel %vm58, %v192, -inf
    %v221 = vmax.f32 %v217, %v220
    %v222 = vsel %vm58, %v194, -inf
    %v223 = vmax.f32 %v219, %v222
    %v224 = vsel %vm58, %v196, -inf
    %v225 = vmax.f32 %v221, %v224
    %v226 = vsel %vm58, %v198, -inf
    %v227 = vmax.f32 %v223, %v226
    %v228 = vsel %vm58, %v200, -inf
    %v229 = vmax.f32 %v225, %v228
    %v230 = vmax.f32 %v227, %v229
    %s231 = scalar_lea.vmem [#allocation2], 128
    %v232 = vld [vmem:[%s231] sm:$0xff]
    %v233 = vld [vmem:[%s231 + $0x8] sm:$0xff]
    %v234 = vld [vmem:[%s231 + $0x10] sm:$0xff]
    %v235 = vld [vmem:[%s231 + $0x18] sm:$0xff]
    %v236 = vld [vmem:[%s231 + $0x20] sm:$0xff]
    %v237 = vld [vmem:[%s231 + $0x28] sm:$0xff]
    %v238 = vld [vmem:[%s231 + $0x30] sm:$0xff]
    %v239 = vld [vmem:[%s231 + $0x38] sm:$0xff]
    %v240 = vld [vmem:[%s231 + $0x40] sm:$0xff]
    %v241 = vld [vmem:[%s231 + $0x48] sm:$0xff]
    %v242 = vld [vmem:[%s231 + $0x50] sm:$0xff]
    %v243 = vld [vmem:[%s231 + $0x58] sm:$0xff]
    %v244 = vld [vmem:[%s231 + $0x60] sm:$0xff]
    %v245 = vld [vmem:[%s231 + $0x68] sm:$0xff]
    %v246 = vld [vmem:[%s231 + $0x70] sm:$0xff]
    %v247 = vld [vmem:[%s231 + $0x78] sm:$0xff]
    %v248 = vsel %vm58, %v232, -inf
    %v249 = vsel %vm58, %v234, -inf
    %v250 = vsel %vm58, %v236, -inf
    %v251 = vmax.f32 %v248, %v250
    %v252 = vsel %vm58, %v238, -inf
    %v253 = vmax.f32 %v249, %v252
    %v254 = vsel %vm58, %v240, -inf
    %v255 = vmax.f32 %v251, %v254
    %v256 = vsel %vm58, %v242, -inf
    %v257 = vmax.f32 %v253, %v256
    %v258 = vsel %vm58, %v244, -inf
    %v259 = vmax.f32 %v255, %v258
    %v260 = vsel %vm58, %v246, -inf
    %v261 = vmax.f32 %v257, %v260
    %v262 = vmax.f32 %v259, %v261
    %v263 = vsel %vm58, %v233, -inf
    %v264 = vsel %vm58, %v235, -inf
    %v265 = vsel %vm58, %v237, -inf
    %v266 = vmax.f32 %v263, %v265
    %v267 = vsel %vm58, %v239, -inf
    %v268 = vmax.f32 %v264, %v267
    %v269 = vsel %vm58, %v241, -inf
    %v270 = vmax.f32 %v266, %v269
    %v271 = vsel %vm58, %v243, -inf
    %v272 = vmax.f32 %v268, %v271
    %v273 = vsel %vm58, %v245, -inf
    %v274 = vmax.f32 %v270, %v273
    %v275 = vsel %vm58, %v247, -inf
    %v276 = vmax.f32 %v272, %v275
    %v277 = vmax.f32 %v274, %v276
    %vm278 = vcmp.ge.s32.totalorder %v24, 0
    %vm279 = vcmp.ge.s32.totalorder %v25, 0
    %vm280 = vcmp.lt.s32.totalorder %v24, 16
    %vm281 = vcmp.lt.s32.totalorder %v25, 16
    %vm282 = vmand %vm278, %vm280
    %vm283 = vmand %vm279, %vm281
    %v284 = vsel %vm282, %v89, -inf
    %v285 = vsel %vm283, %v120, -inf
    %v286 = vsel %vm58, %v284, -inf
    %v287 = vsel %vm58, %v285, -inf
    %v288 = vmax.f32 %v286, %v287
    %v289 = vrot.slane %v288, 4
    %v290 = vmax.f32 %v288, %v289
    %v291 = vrot.slane %v290, 2
    %v292 = vmax.f32 %v290, %v291
    %v293 = vrot.slane %v292, 1
    %v294 = vmax.f32 %v292, %v293
    %vm295 = vcmp.lt.s32.totalorder %v24, 10
    %vm296 = vcmp.lt.s32.totalorder %v25, 10
    %vm297 = vmand %vm278, %vm295
    %vm298 = vmand %vm279, %vm296
    %v299 = vsel %vm297, %v121, -inf
    %v300 = vsel %vm298, %v122, -inf
    %v301 = vsel %vm58, %v299, -inf
    %v302 = vsel %vm58, %v300, -inf
    %v303 = vmax.f32 %v301, %v302
    %v304 = vrot.slane %v303, 4
    %v305 = vmax.f32 %v303, %v304
    %v306 = vrot.slane %v305, 2
    %v307 = vmax.f32 %v305, %v306
    %v308 = vrot.slane %v307, 1
    %v309 = vmax.f32 %v307, %v308
    %vm310 = vcmp.ge.s32.totalorder %v24, 6
    %vm311 = vcmp.ge.s32.totalorder %v25, 6
    %vm312 = vmand %vm310, %vm280
    %vm313 = vmand %vm311, %vm281
    %v314 = vsel %vm312, %v121, -inf
    %v315 = vsel %vm313, %v122, -inf
    %v316 = vsel %vm58, %v314, -inf
    %v317 = vsel %vm58, %v315, -inf
    %v318 = vmax.f32 %v316, %v317
    %v319 = vrot.slane %v318, 4
    %v320 = vmax.f32 %v318, %v319
    %v321 = vrot.slane %v320, 2
    %v322 = vmax.f32 %v320, %v321
    %v323 = vrot.slane %v322, 1
    %v324 = vmax.f32 %v322, %v323
    %v325 = vsel %vm297, %v162, -inf
    %v326 = vsel %vm298, %v181, -inf
    %v327 = vsel %vm58, %v325, -inf
    %v328 = vsel %vm58, %v326, -inf
    %v329 = vmax.f32 %v327, %v328
    %v330 = vrot.slane %v329, 4
    %v331 = vmax.f32 %v329, %v330
    %v332 = vrot.slane %v331, 2
    %v333 = vmax.f32 %v331, %v332
    %v334 = vrot.slane %v333, 1
    %v335 = vmax.f32 %v333, %v334
    %v336 = vsel %vm312, %v162, -inf
    %v337 = vsel %vm313, %v181, -inf
    %v338 = vsel %vm58, %v336, -inf
    %v339 = vsel %vm58, %v337, -inf
    %v340 = vmax.f32 %v338, %v339
    %v341 = vrot.slane %v340, 4
    %v342 = vmax.f32 %v340, %v341
    %v343 = vrot.slane %v342, 2
    %v344 = vmax.f32 %v342, %v343
    %v345 = vrot.slane %v344, 1
    %v346 = vmax.f32 %v344, %v345
    %vm347 = vcmp.lt.s32.totalorder %v24, 8
    %vm348 = vcmp.lt.s32.totalorder %v25, 8
    %vm349 = vmand %vm278, %vm347
    %vm350 = vmand %vm279, %vm348
    %v351 = vsel %vm349, %v182, -inf
    %v352 = vsel %vm350, %v183, -inf
    %v353 = vsel %vm58, %v351, -inf
    %v354 = vsel %vm58, %v352, -inf
    %v355 = vmax.f32 %v353, %v354
    %v356 = vrot.slane %v355, 4
    %v357 = vmax.f32 %v355, %v356
    %v358 = vrot.slane %v357, 2
    %v359 = vmax.f32 %v357, %v358
    %v360 = vrot.slane %v359, 1
    %v361 = vmax.f32 %v359, %v360
    %vm362 = vcmp.ge.s32.totalorder %v24, 4
    %vm363 = vcmp.ge.s32.totalorder %v25, 4
    %vm364 = vcmp.lt.s32.totalorder %v24, 12
    %vm365 = vcmp.lt.s32.totalorder %v25, 12
    %vm366 = vmand %vm362, %vm364
    %vm367 = vmand %vm363, %vm365
    %v368 = vsel %vm366, %v182, -inf
    %v369 = vsel %vm367, %v183, -inf
    %v370 = vsel %vm58, %v368, -inf
    %v371 = vsel %vm58, %v369, -inf
    %v372 = vmax.f32 %v370, %v371
    %v373 = vrot.slane %v372, 4
    %v374 = vmax.f32 %v372, %v373
    %v375 = vrot.slane %v374, 2
    %v376 = vmax.f32 %v374, %v375
    %v377 = vrot.slane %v376, 1
    %v378 = vmax.f32 %v376, %v377
    %vm379 = vcmp.ge.s32.totalorder %v24, 8
    %vm380 = vcmp.ge.s32.totalorder %v25, 8
    %vm381 = vmand %vm379, %vm280
    %vm382 = vmand %vm380, %vm281
    %v383 = vsel %vm381, %v182, -inf
    %v384 = vsel %vm382, %v183, -inf
    %v385 = vsel %vm58, %v383, -inf
    %v386 = vsel %vm58, %v384, -inf
    %v387 = vmax.f32 %v385, %v386
    %v388 = vrot.slane %v387, 4
    %v389 = vmax.f32 %v387, %v388
    %v390 = vrot.slane %v389, 2
    %v391 = vmax.f32 %v389, %v390
    %v392 = vrot.slane %v391, 1
    %v393 = vmax.f32 %v391, %v392
    %v394 = vsel %vm349, %v215, -inf
    %v395 = vsel %vm350, %v230, -inf
    %v396 = vsel %vm58, %v394, -inf
    %v397 = vsel %vm58, %v395, -inf
    %v398 = vmax.f32 %v396, %v397
    %v399 = vrot.slane %v398, 4
    %v400 = vmax.f32 %v398, %v399
    %v401 = vrot.slane %v400, 2
    %v402 = vmax.f32 %v400, %v401
    %v403 = vrot.slane %v402, 1
    %v404 = vmax.f32 %v402, %v403
    %v405 = vsel %vm366, %v215, -inf
    %v406 = vsel %vm367, %v230, -inf
    %v407 = vsel %vm58, %v405, -inf
    %v408 = vsel %vm58, %v406, -inf
    %v409 = vmax.f32 %v407, %v408
    %v410 = vrot.slane %v409, 4
    %v411 = vmax.f32 %v409, %v410
    %v412 = vrot.slane %v411, 2
    %v413 = vmax.f32 %v411, %v412
    %v414 = vrot.slane %v413, 1
    %v415 = vmax.f32 %v413, %v414
    %v416 = vsel %vm381, %v215, -inf
    %v417 = vsel %vm382, %v230, -inf
    %v418 = vsel %vm58, %v416, -inf
    %v419 = vsel %vm58, %v417, -inf
    %v420 = vmax.f32 %v418, %v419
    %v421 = vrot.slane %v420, 4
    %v422 = vmax.f32 %v420, %v421
    %v423 = vrot.slane %v422, 2
    %v424 = vmax.f32 %v422, %v423
    %v425 = vrot.slane %v424, 1
    %v426 = vmax.f32 %v424, %v425
    %v427 = vsel %vm349, %v262, -inf
    %v428 = vsel %vm350, %v277, -inf
    %v429 = vsel %vm58, %v427, -inf
    %v430 = vsel %vm58, %v428, -inf
    %v431 = vmax.f32 %v429, %v430
    %v432 = vrot.slane %v431, 4
    %v433 = vmax.f32 %v431, %v432
    %v434 = vrot.slane %v433, 2
    %v435 = vmax.f32 %v433, %v434
    %v436 = vrot.slane %v435, 1
    %v437 = vmax.f32 %v435, %v436
    %v438 = vsel %vm366, %v262, -inf
    %v439 = vsel %vm367, %v277, -inf
    %v440 = vsel %vm58, %v438, -inf
    %v441 = vsel %vm58, %v439, -inf
    %v442 = vmax.f32 %v440, %v441
    %v443 = vrot.slane %v442, 4
    %v444 = vmax.f32 %v442, %v443
    %v445 = vrot.slane %v444, 2
    %v446 = vmax.f32 %v444, %v445
    %v447 = vrot.slane %v446, 1
    %v448 = vmax.f32 %v446, %v447
    %v449 = vsel %vm381, %v262, -inf
    %v450 = vsel %vm382, %v277, -inf
    %v451 = vsel %vm58, %v449, -inf
    %v452 = vsel %vm58, %v450, -inf
    %v453 = vmax.f32 %v451, %v452
    %v454 = vrot.slane %v453, 4
    %v455 = vmax.f32 %v453, %v454
    %v456 = vrot.slane %v455, 2
    %v457 = vmax.f32 %v455, %v456
    %v458 = vrot.slane %v457, 1
    %v459 = vmax.f32 %v457, %v458
    %vm460 = vcmask 1041408
    %v461 = vsel %vm460, %v294, %v309
    %vm462 = vcmask 1042432
    %v463 = vsel %vm462, %v461, %v324
    %vm464 = vcmask 1043456
    %v465 = vsel %vm464, %v463, %v335
    %vm466 = vcmask 1044480
    %v467 = vsel %vm466, %v465, %v346
    %vm468 = vcmask 1045504
    %v469 = vsel %vm468, %v467, %v361
    %vm470 = vcmask 1046528
    %v471 = vsel %vm470, %v469, %v378
    %vm472 = vcmask 1040384
    %v473 = vsel %vm472, %v393, %v404
    %v474 = vsel %vm460, %v473, %v415
    %v475 = vsel %vm462, %v474, %v426
    %v476 = vsel %vm464, %v475, %v437
    %v477 = vsel %vm466, %v476, %v448
    %v478 = vsel %vm468, %v477, %v459
    %v479 = vsel %vm470, %v478, 0.0
    %480 = vst.msk [vmem:[#allocation5] sm:$0xff] %vm58, %v471
    %481 = vst.msk [vmem:[#allocation5 + $0x8] sm:$0xff] %vm58, %v479
    // Predicated region
    $region10: #{tpu_custom_call.1} parent=1 // pred_check
      _
    $region11: #{tpu_custom_call.1} parent=1 // pred_check_branch
      %483 = sbr.rel (0) target = $region13
    $region12: #{tpu_custom_call.1} parent=1 // pred_region
      %s485 = ssub.s32 256, 256
      %486 = vsyncadd [#allocation4], %s485
      %s487 = sshll.u32 [#allocation5], 4
      %s488 = int_to_ptr.vmem [resolvable:$true] %s487
      %493 = dma.vmem_to_hbm [thread:$0]  %s488, 256, %s1, [#allocation4], 128, 128, 8
    $region13: #{tpu_custom_call.1} parent=1 // pred_fallthru
      _
    // Predicated region
    $region14: #{tpu_custom_call.1} parent=1 // pred_check
      _
    $region15: #{tpu_custom_call.1} parent=1 // pred_check_branch
      %495 = sbr.rel (0) target = $region17
    $region16: #{tpu_custom_call.1} parent=1 // pred_region
      %496 = dma.done [#allocation4], 256
    $region17: #{tpu_custom_call.1} parent=1 // pred_fallthru
      _
    %497 = vsyncpa [#allocation3], 1
    %498 = vsyncpa [#allocation4], 1

</llo_original>
